<compile_context>
chip_gen: v6e
topology: v6e:2x2x1
jax: 0.10.0
libtpu: 0.0.40
codegen_flags: <defaults>
</compile_context>

<pallas_src>
import functools

import jax
import jax.numpy as jnp
from jax.experimental import pallas as pl
from jax.experimental.pallas import tpu as pltpu


def _round_up(x, m):
    return ((x + m - 1) // m) * m


def _bf16_epilogue_default():
    """bf16 bias+tanh epilogue on v6e/v7x (bf16 VPU/EUP); keep f32 on v5e."""
    try:
        kind = jax.devices()[0].device_kind.lower()
    except Exception:
        return True
    return not ("v5 lite" in kind or "v5lite" in kind or "v5e" in kind)


def _head_kernel(x_ref, w1_ref, b1_ref, w2_ref, b2_ref, o_ref, *, bf16_epilogue):
    # x_ref:  (TB, H)  f32/bf16   w1_ref: (H, H)  bf16   b1_ref: (1, H)  f32
    # w2_ref: (H, Lp)  bf16       b2_ref: (1, Lp) f32    o_ref:  (TB, Lp) f32
    x = x_ref[...]
    if x.dtype != jnp.bfloat16:
        x = x.astype(jnp.bfloat16)

    # dense: x @ W1 on the MXU, f32 accumulation.
    h = jnp.dot(x, w1_ref[...], preferred_element_type=jnp.float32)
    h = h + b1_ref[...]
    if bf16_epilogue:
        # v6e/v7x: bf16 VPU/EUP path — tanh in bf16, feeds the second MXU pass directly.
        h = jnp.tanh(h.astype(jnp.bfloat16))
    else:
        # v5e: no bf16 VPU/EUP — keep elementwise math in f32, cast only for the MXU.
        h = jnp.tanh(h).astype(jnp.bfloat16)

    # out_proj: bf16 operands, f32 accumulate + bias; lane-dense (Lp % 128 == 0) store.
    out = jnp.dot(h, w2_ref[...], preferred_element_type=jnp.float32) + b2_ref[...]
    o_ref[...] = out.astype(o_ref.dtype)


def prepare_head_params(w_dense, b_dense, w_out, b_out):
    """One-time parameter preparation (call once at init, NOT per forward).

    w_dense: (H, H) in (in, out) layout, b_dense: (H,)
    w_out:   (H, L) in (in, out) layout, b_out:   (L,)
    Returns (w1 bf16 (H,H), b1 f32 (1,H), w2 bf16 (H,Lp), b2 f32 (1,Lp)) with the
    out-projection zero-padded along the label dim to a multiple of 128 lanes.
    """
    H = w_dense.shape[0]
    L = w_out.shape[1]
    Lp = _round_up(L, 128)
    w1 = jnp.asarray(w_dense, jnp.bfloat16)
    b1 = jnp.asarray(b_dense, jnp.float32).reshape(1, H)
    w2 = jnp.pad(jnp.asarray(w_out, jnp.bfloat16), ((0, 0), (0, Lp - L)))
    b2 = jnp.pad(jnp.asarray(b_out, jnp.float32), (0, Lp - L)).reshape(1, Lp)
    return w1, b1, w2, b2


@functools.partial(jax.jit,
                   static_argnames=("num_labels", "block_b", "bf16_epilogue"))
def roberta_classification_head(x, w1, b1, w2, b2, *, num_labels,
                                block_b=512, bf16_epilogue=None):
    """x: (B, H) f32 or bf16; (w1, b1, w2, b2) from prepare_head_params.
    Returns logits (B, num_labels) float32."""
    if bf16_epilogue is None:
        bf16_epilogue = _bf16_epilogue_default()

    B, H = x.shape
    Lp = w2.shape[1]

    # Batch tile: multiple of 8 sublanes, up to block_b rows.  No batch padding of x:
    # grid = cdiv(B, TB) and Pallas masks the partial last block on store.
    TB = min(block_b, _round_up(B, 8))
    # Megacore (v7x): keep >= 2 grid steps so the "parallel" batch axis can be
    # sharded across both TensorCores when the batch allows it.
    if pl.cdiv(B, TB) < 2 and B > 8:
        TB = _round_up(pl.cdiv(B, 2), 8)
    grid_b = pl.cdiv(B, TB)

    cost = pl.CostEstimate(
        flops=2 * B * H * H + 2 * B * H * Lp,
        transcendentals=B * H,
        bytes_accessed=(B * H * x.dtype.itemsize + H * H * 2 + H * 4
                        + H * Lp * 2 + Lp * 4 + B * Lp * 4),
    )

    out_padded = pl.pallas_call(
        functools.partial(_head_kernel, bf16_epilogue=bf16_epilogue),
        out_shape=jax.ShapeDtypeStruct((B, Lp), jnp.float32),
        grid_spec=pltpu.PrefetchScalarGridSpec(
            num_scalar_prefetch=0,
            grid=(grid_b,),
            in_specs=[
                pl.BlockSpec((TB, H), lambda i: (i, 0)),   # x tile (pipelined)
                pl.BlockSpec((H, H), lambda i: (0, 0)),    # W1 (VMEM-resident)
                pl.BlockSpec((1, H), lambda i: (0, 0)),    # b1
                pl.BlockSpec((H, Lp), lambda i: (0, 0)),   # W2 (VMEM-resident)
                pl.BlockSpec((1, Lp), lambda i: (0, 0)),   # b2
            ],
            out_specs=pl.BlockSpec((TB, Lp), lambda i: (i, 0)),
        ),
        compiler_params=pltpu.CompilerParams(
            dimension_semantics=("parallel",),
            # Working set at default tiles (H=1024) is ~10-20 MiB; 32 MiB keeps
            # headroom under v7x's 64 MiB physical VMEM per TensorCore.
            vmem_limit_bytes=32 << 20,
        ),
        cost_estimate=cost,
    )(x, w1, b1, w2, b2)

    return out_padded[:, :num_labels]


if __name__ == "__main__":
    # Small shapes consistent with the module's forward: (batch, hidden) matrix input.
    # B=12 deliberately exercises a partial (masked) last batch block and a 2-step grid.
    B, H, L = 12, 256, 7  # batch, bert_hidden_dim (scaled down), num_labels

    key = jax.random.PRNGKey(0)
    kx, kw1, kb1, kw2, kb2 = jax.random.split(key, 5)

    x = jax.random.normal(kx, (B, H), dtype=jnp.float32)

    # PyTorch nn.Linear weight is (out, in); transpose to (in, out) for x @ W.
    w_dense_pt = jax.random.normal(kw1, (H, H), dtype=jnp.float32) * 0.02
    b_dense = jax.random.normal(kb1, (H,), dtype=jnp.float32) * 0.02
    w_out_pt = jax.random.normal(kw2, (L, H), dtype=jnp.float32) * 0.02
    b_out = jax.random.normal(kb2, (L,), dtype=jnp.float32) * 0.02

    # One-time parameter prep (bf16 cast + label-dim lane padding), outside the jit path.
    params = prepare_head_params(w_dense_pt.T, b_dense, w_out_pt.T, b_out)

    logits = roberta_classification_head(x, *params, num_labels=L)
    logits = jax.block_until_ready(logits)

    # Reference in plain JAX (dropout = identity in eval mode).  bf16 MXU operands
    # with f32 accumulation -> loosened tolerance vs. pure f32.
    ref = jnp.tanh(x @ w_dense_pt.T + b_dense) @ w_out_pt.T + b_out
    assert logits.shape == (B, L)
    assert jnp.allclose(logits, ref, atol=3e-2, rtol=3e-2), (
        float(jnp.max(jnp.abs(logits - ref))))

    print("KERNEL_OK")
</pallas_src>

<mosaic_0001>
module attributes {stable_mosaic.version = 11 : i64} {
  func.func @_head_kernel(%arg0: i32, %arg1: memref<8x256xf32, #tpu.memory_space<vmem>>, %arg2: memref<256x256xbf16, #tpu.memory_space<vmem>>, %arg3: memref<1x256xf32, #tpu.memory_space<vmem>>, %arg4: memref<256x128xbf16, #tpu.memory_space<vmem>>, %arg5: memref<1x128xf32, #tpu.memory_space<vmem>>, %arg6: memref<8x128xf32, #tpu.memory_space<vmem>>) attributes {dimension_semantics = [#tpu.dimension_semantics<parallel>], iteration_bounds = array<i64: 2>, scalar_prefetch = 0 : i64, scratch_operands = 0 : i64, tpu.core_type = #tpu.core_type<tc>, window_params = [{transform_indices = @transform_0, window_bounds = array<i64: 8, 256>}, {pipeline_mode = #tpu.pipeline_mode<synchronous>, transform_indices = @transform_1, window_bounds = array<i64: 256, 256>}, {pipeline_mode = #tpu.pipeline_mode<synchronous>, transform_indices = @transform_2, window_bounds = array<i64: 1, 256>}, {pipeline_mode = #tpu.pipeline_mode<synchronous>, transform_indices = @transform_3, window_bounds = array<i64: 256, 128>}, {pipeline_mode = #tpu.pipeline_mode<synchronous>, transform_indices = @transform_4, window_bounds = array<i64: 1, 128>}, {transform_indices = @transform_5, window_bounds = array<i64: 8, 128>}]} {
    %c0 = arith.constant 0 : index
    %c0_0 = arith.constant 0 : index
    %0 = vector.load %arg1[%c0, %c0_0] : memref<8x256xf32, #tpu.memory_space<vmem>>, vector<8x256xf32>
    %1 = arith.truncf %0 : vector<8x256xf32> to vector<8x256xbf16>
    %c0_1 = arith.constant 0 : index
    %c0_2 = arith.constant 0 : index
    %2 = vector.load %arg2[%c0_1, %c0_2] : memref<256x256xbf16, #tpu.memory_space<vmem>>, vector<256x256xbf16>
    %cst = arith.constant dense<0.000000e+00> : vector<8x256xf32>
    %3 = tpu.matmul %1, %2, %cst {dimension_numbers = #tpu.dot_dimension_numbers<[1], [0], [0], [1], [0, 0, 1, 1], [], []>} : vector<8x256xbf16>, vector<256x256xbf16>, vector<8x256xf32> -> vector<8x256xf32>
    %c0_3 = arith.constant 0 : index
    %c0_4 = arith.constant 0 : index
    %4 = vector.load %arg3[%c0_3, %c0_4] : memref<1x256xf32, #tpu.memory_space<vmem>>, vector<1x256xf32>
    %5 = vector.broadcast %4 : vector<1x256xf32> to vector<8x256xf32>
    %6 = arith.addf %3, %5 : vector<8x256xf32>
    %7 = arith.truncf %6 : vector<8x256xf32> to vector<8x256xbf16>
    %8 = math.tanh %7 : vector<8x256xbf16>
    %c0_5 = arith.constant 0 : index
    %c0_6 = arith.constant 0 : index
    %9 = vector.load %arg4[%c0_5, %c0_6] : memref<256x128xbf16, #tpu.memory_space<vmem>>, vector<256x128xbf16>
    %cst_7 = arith.constant dense<0.000000e+00> : vector<8x128xf32>
    %10 = tpu.matmul %8, %9, %cst_7 {dimension_numbers = #tpu.dot_dimension_numbers<[1], [0], [0], [1], [0, 0, 1, 1], [], []>} : vector<8x256xbf16>, vector<256x128xbf16>, vector<8x128xf32> -> vector<8x128xf32>
    %c0_8 = arith.constant 0 : index
    %c0_9 = arith.constant 0 : index
    %11 = vector.load %arg5[%c0_8, %c0_9] : memref<1x128xf32, #tpu.memory_space<vmem>>, vector<1x128xf32>
    %12 = vector.broadcast %11 : vector<1x128xf32> to vector<8x128xf32>
    %13 = arith.addf %10, %12 : vector<8x128xf32>
    %c0_10 = arith.constant 0 : index
    %c0_11 = arith.constant 0 : index
    %14 = vector.load %arg6[%c0_10, %c0_11] : memref<8x128xf32, #tpu.memory_space<vmem>>, vector<8x128xf32>
    tpu.vector_store %arg6[%c0_10, %c0_11], %13 {strides = array<i32>} : memref<8x128xf32, #tpu.memory_space<vmem>>, vector<8x128xf32>,
    return
  }
  func.func @transform_0(%arg0: i32) -> (i32, i32) {
    %c0_i32 = arith.constant 0 : i32
    %c0_i32_0 = arith.constant 0 : i32
    return %arg0, %c0_i32 : i32, i32
  }
  func.func @transform_1(%arg0: i32) -> (i32, i32) {
    %c0_i32 = arith.constant 0 : i32
    %c0_i32_0 = arith.constant 0 : i32
    %c0_i32_1 = arith.constant 0 : i32
    return %c0_i32, %c0_i32_0 : i32, i32
  }
  func.func @transform_2(%arg0: i32) -> (i32, i32) {
    %c0_i32 = arith.constant 0 : i32
    %c0_i32_0 = arith.constant 0 : i32
    %c0_i32_1 = arith.constant 0 : i32
    return %c0_i32, %c0_i32_0 : i32, i32
  }
  func.func @transform_3(%arg0: i32) -> (i32, i32) {
    %c0_i32 = arith.constant 0 : i32
    %c0_i32_0 = arith.constant 0 : i32
    %c0_i32_1 = arith.constant 0 : i32
    return %c0_i32, %c0_i32_0 : i32, i32
  }
  func.func @transform_4(%arg0: i32) -> (i32, i32) {
    %c0_i32 = arith.constant 0 : i32
    %c0_i32_0 = arith.constant 0 : i32
    %c0_i32_1 = arith.constant 0 : i32
    return %c0_i32, %c0_i32_0 : i32, i32
  }
  func.func @transform_5(%arg0: i32) -> (i32, i32) {
    %c0_i32 = arith.constant 0 : i32
    %c0_i32_0 = arith.constant 0 : i32
    return %arg0, %c0_i32 : i32, i32
  }
}

</mosaic_0001>

<llo_original>
// kernel: roberta_classification_head.1
$region0: #{roberta_classification_head.1}
  #allocation0 [shape = 'u32[]', space=smem, size = 0x4, offset = 0x4, fixed_abs, tag = 'smem constant byte address 0x4 - core index']
  #allocation1 [shape = 'u32[144,128]{1,0:T(1,128)}', space=vmem, size = 0x12000, scoped, tag = 'internal scratch']
  %s0 = inlined_call_operand.hbm [shape: f32[12,256], index: 0, kind: input, shape index: {}]
  %s1 = inlined_call_operand.hbm [shape: bf16[256,256], index: 1, kind: input, shape index: {}]
  %s2 = inlined_call_operand.vmem [shape: f32[1,256], index: 2, kind: input, shape index: {}]
  %s3 = inlined_call_operand.hbm [shape: bf16[256,128], index: 3, kind: input, shape index: {}]
  %s4 = inlined_call_operand.vmem [shape: f32[1,128], index: 4, kind: input, shape index: {}]
  %s5 = inlined_call_operand.vmem [shape: f32[12,128], index: 5, kind: output, shape index: {}]
  %s6 = sld [smem:[#allocation0]]
  $region65: #{roberta_classification_head.1} parent=0
    _
  %s8 = ssub.s32 1, %s6
  %s9 = scalar_select 0, %s8, %s6
  $region1: #{roberta_classification_head.1} parent=0
    #allocation2 [shape = 'u8[16384]{0}', space=vmem, size = 0x4000, scoped, tag = 'input window, operand 0']
    #allocation3 [shape = 's32[2]{0}', space=sflag, size = 0x8, scoped, tag = 'scoped memory for roberta_classification_head.1']
    #allocation4 [shape = 'u8[131072]{0}', space=vmem, size = 0x20000, scoped, tag = 'input window, operand 1, single buffered']
    #allocation5 [shape = 's32[1]{0}', space=sflag, size = 0x4, scoped, tag = 'scoped memory for roberta_classification_head.1']
    #allocation6 [shape = 'u8[65536]{0}', space=vmem, size = 0x10000, scoped, tag = 'input window, operand 3, single buffered']
    %10 = vsyncpa [#allocation3], 0
    %s11 = scalar_lea.sflag [#allocation3], 1
    %12 = vsyncpa %s11, 0
    %13 = vsyncpa [#allocation5], 0
    loop: start=0, step=1, limit=4
    $region2: #{roberta_classification_head.1} parent=1 // loop_pre_header
      _
    $region3: #{roberta_classification_head.1} parent=1 // loop_header
      %s15 = sphi 0, %s19
      %p16 = scmp.ge.s32.totalorder %s15, 4
      %s25 = sphi 0, %s27
      %s28 = sphi 0, %s25
      %s29 = sphi 0, %s28
      %s45 = sphi 0, %s29
      %s49 = sphi 0, %s49
      %s51 = sphi 0, %s49
      %s52 = sphi 0, %s51
      %s66 = sphi 0, %s52
      %s70 = sphi 0, %s70
      %s72 = sphi 0, %s70
      %s73 = sphi 0, %s72
      %s87 = sphi 0, %s73
      %s91 = sphi 0, %s91
      %s93 = sphi 0, %s91
      %s94 = sphi 0, %s93
      %s108 = sphi 0, %s94
      %s112 = sphi 0, %s112
      %s114 = sphi 0, %s112
      %s115 = sphi 0, %s114
      %s129 = sphi 0, %s115
      %s135 = sphi 0, %s137
      %s138 = sphi 0, %s135
      %s139 = sphi 0, %s138
      %s155 = sphi 0, %s139
    $region4: #{roberta_classification_head.1} parent=1 // loop_header_branch
      %18 = sbr.rel (%p16) target = $region8
    $region5: #{roberta_classification_head.1} parent=1 // loop_body
      %s20 = ssub.s32 %s15, 1
      %s21 = ssub.s32 %s15, 2
      %s22 = sadd.s32 %s15, 1
      %s23 = ssub.s32 %s15, %s22
      %p24 = scmp.eq.s32.totalorder %s23, 0
      %s26 = sadd.s32 %s25, 1
      %s27 = scalar_select %p24, %s25, %s26
      %p30 = pneg %p24
      %p31 = scmp.eq.s32.totalorder %s15, 1
      %p32 = por %p30, %p31
      %p33 = scmp.ne.s32.totalorder %s25, %s28
      %p34 = scmp.eq.s32.totalorder %s15, 0
      %p35 = por %p33, %p34
      %p36 = scmp.ne.s32.totalorder %s25, %s28
      %p37 = scmp.eq.s32.totalorder %s20, 1
      %p38 = por %p36, %p37
      %p39 = scmp.ne.s32.totalorder %s28, %s29
      %p40 = scmp.eq.s32.totalorder %s20, 0
      %p41 = por %p39, %p40
      %p42 = scmp.ne.s32.totalorder %s28, %s29
      %p43 = scmp.eq.s32.totalorder %s21, 1
      %p44 = por %p42, %p43
      %p46 = scmp.ne.s32.totalorder %s29, %s45
      %p47 = scmp.eq.s32.totalorder %s21, 0
      %p48 = por %p46, %p47
      %s50 = sadd.s32 %s49, 1
      %p53 = scmp.eq.s32.totalorder %s15, 1
      %p54 = scmp.ne.s32.totalorder %s49, %s51
      %p55 = scmp.eq.s32.totalorder %s15, 0
      %p56 = por %p54, %p55
      %p57 = scmp.ne.s32.totalorder %s49, %s51
      %p58 = scmp.eq.s32.totalorder %s20, 1
      %p59 = por %p57, %p58
      %p60 = scmp.ne.s32.totalorder %s51, %s52
      %p61 = scmp.eq.s32.totalorder %s20, 0
      %p62 = por %p60, %p61
      %p63 = scmp.ne.s32.totalorder %s51, %s52
      %p64 = scmp.eq.s32.totalorder %s21, 1
      %p65 = por %p63, %p64
      %p67 = scmp.ne.s32.totalorder %s52, %s66
      %p68 = scmp.eq.s32.totalorder %s21, 0
      %p69 = por %p67, %p68
      %s71 = sadd.s32 %s70, 1
      %p74 = scmp.eq.s32.totalorder %s15, 1
      %p75 = scmp.ne.s32.totalorder %s70, %s72
      %p76 = scmp.eq.s32.totalorder %s15, 0
      %p77 = por %p75, %p76
      %p78 = scmp.ne.s32.totalorder %s70, %s72
      %p79 = scmp.eq.s32.totalorder %s20, 1
      %p80 = por %p78, %p79
      %p81 = scmp.ne.s32.totalorder %s72, %s73
      %p82 = scmp.eq.s32.totalorder %s20, 0
      %p83 = por %p81, %p82
      %p84 = scmp.ne.s32.totalorder %s72, %s73
      %p85 = scmp.eq.s32.totalorder %s21, 1
      %p86 = por %p84, %p85
      %p88 = scmp.ne.s32.totalorder %s73, %s87
      %p89 = scmp.eq.s32.totalorder %s21, 0
      %p90 = por %p88, %p89
      %s92 = sadd.s32 %s91, 1
      %p95 = scmp.eq.s32.totalorder %s15, 1
      %p96 = scmp.ne.s32.totalorder %s91, %s93
      %p97 = scmp.eq.s32.totalorder %s15, 0
      %p98 = por %p96, %p97
      %p99 = scmp.ne.s32.totalorder %s91, %s93
      %p100 = scmp.eq.s32.totalorder %s20, 1
      %p101 = por %p99, %p100
      %p102 = scmp.ne.s32.totalorder %s93, %s94
      %p103 = scmp.eq.s32.totalorder %s20, 0
      %p104 = por %p102, %p103
      %p105 = scmp.ne.s32.totalorder %s93, %s94
      %p106 = scmp.eq.s32.totalorder %s21, 1
      %p107 = por %p105, %p106
      %p109 = scmp.ne.s32.totalorder %s94, %s108
      %p110 = scmp.eq.s32.totalorder %s21, 0
      %p111 = por %p109, %p110
      %s113 = sadd.s32 %s112, 1
      %p116 = scmp.eq.s32.totalorder %s15, 1
      %p117 = scmp.ne.s32.totalorder %s112, %s114
      %p118 = scmp.eq.s32.totalorder %s15, 0
      %p119 = por %p117, %p118
      %p120 = scmp.ne.s32.totalorder %s112, %s114
      %p121 = scmp.eq.s32.totalorder %s20, 1
      %p122 = por %p120, %p121
      %p123 = scmp.ne.s32.totalorder %s114, %s115
      %p124 = scmp.eq.s32.totalorder %s20, 0
      %p125 = por %p123, %p124
      %p126 = scmp.ne.s32.totalorder %s114, %s115
      %p127 = scmp.eq.s32.totalorder %s21, 1
      %p128 = por %p126, %p127
      %p130 = scmp.ne.s32.totalorder %s115, %s129
      %p131 = scmp.eq.s32.totalorder %s21, 0
      %p132 = por %p130, %p131
      %s133 = ssub.s32 %s15, %s22
      %p134 = scmp.eq.s32.totalorder %s133, 0
      %s136 = sadd.s32 %s135, 1
      %s137 = scalar_select %p134, %s135, %s136
      %p140 = pneg %p134
      %p141 = scmp.eq.s32.totalorder %s15, 1
      %p142 = por %p140, %p141
      %p143 = scmp.ne.s32.totalorder %s135, %s138
      %p144 = scmp.eq.s32.totalorder %s15, 0
      %p145 = por %p143, %p144
      %p146 = scmp.ne.s32.totalorder %s135, %s138
      %p147 = scmp.eq.s32.totalorder %s20, 1
      %p148 = por %p146, %p147
      %p149 = scmp.ne.s32.totalorder %s138, %s139
      %p150 = scmp.eq.s32.totalorder %s20, 0
      %p151 = por %p149, %p150
      %p152 = scmp.ne.s32.totalorder %s138, %s139
      %p153 = scmp.eq.s32.totalorder %s21, 1
      %p154 = por %p152, %p153
      %p156 = scmp.ne.s32.totalorder %s139, %s155
      %p157 = scmp.eq.s32.totalorder %s21, 0
      %p158 = por %p156, %p157
      %p159 = scmp.le.s32.totalorder 1, %s15
      %p160 = scmp.lt.s32.totalorder %s15, 3
      %p161 = pnand %p159, %p160
      %p162 = pneg %p161
      // Predicated region
      $region9: #{roberta_classification_head.1} parent=5 // pred_check
        _
      $region10: #{roberta_classification_head.1} parent=5 // pred_check_branch
        %164 = sbr.rel (%p161) target = $region12
      $region11: #{roberta_classification_head.1} parent=5 // pred_region
        %s165 = ssub.s32 %s15, 1
        // Predicated region
        $region13: #{roberta_classification_head.1} parent=11 // pred_check
          %p166 = pneg %p62
        $region14: #{roberta_classification_head.1} parent=11 // pred_check_branch
          %168 = sbr.rel (%p166) target = $region16
        $region15: #{roberta_classification_head.1} parent=11 // pred_region
          %s170 = ssub.s32 4096, 4096
          %171 = vsyncadd [#allocation5], %s170
          %s172 = sshll.u32 [#allocation4], 4
          %s173 = int_to_ptr.vmem [resolvable:$true] %s172
          %178 = dma.hbm_to_vmem [thread:$0]  %s1, 4096, %s173, [#allocation5], 128, 128, 8
        $region16: #{roberta_classification_head.1} parent=11 // pred_fallthru
          _
        // Predicated region
        $region17: #{roberta_classification_head.1} parent=11 // pred_check
          %p179 = pneg %p83
        $region18: #{roberta_classification_head.1} parent=11 // pred_check_branch
          %181 = sbr.rel (%p179) target = $region20
        $region19: #{roberta_classification_head.1} parent=11 // pred_region
          _
        $region20: #{roberta_classification_head.1} parent=11 // pred_fallthru
          _
        // Predicated region
        $region21: #{roberta_classification_head.1} parent=11 // pred_check
          %p182 = pneg %p104
        $region22: #{roberta_classification_head.1} parent=11 // pred_check_branch
          %184 = sbr.rel (%p182) target = $region24
        $region23: #{roberta_classification_head.1} parent=11 // pred_region
          %s186 = ssub.s32 2048, 2048
          %187 = vsyncadd [#allocation5], %s186
          %s188 = sshll.u32 [#allocation6], 4
          %s189 = int_to_ptr.vmem [resolvable:$true] %s188
          %194 = dma.hbm_to_vmem [thread:$0]  %s3, 2048, %s189, [#allocation5], 64, 64, 4
        $region24: #{roberta_classification_head.1} parent=11 // pred_fallthru
          _
        // Predicated region
        $region25: #{roberta_classification_head.1} parent=11 // pred_check
          %p195 = pneg %p125
        $region26: #{roberta_classification_head.1} parent=11 // pred_check_branch
          %197 = sbr.rel (%p195) target = $region28
        $region27: #{roberta_classification_head.1} parent=11 // pred_region
          _
        $region28: #{roberta_classification_head.1} parent=11 // pred_fallthru
          _
      $region12: #{roberta_classification_head.1} parent=5 // pred_fallthru
        _
      %p198 = scmp.lt.s32.totalorder %s15, 2
      // Predicated region
      $region29: #{roberta_classification_head.1} parent=5 // pred_check
        %p199 = pneg %p198
      $region30: #{roberta_classification_head.1} parent=5 // pred_check_branch
        %201 = sbr.rel (%p199) target = $region32
      $region31: #{roberta_classification_head.1} parent=5 // pred_region
        // Predicated region
        $region33: #{roberta_classification_head.1} parent=31 // pred_check
          %p202 = pneg %p35
        $region34: #{roberta_classification_head.1} parent=31 // pred_check_branch
          %204 = sbr.rel (%p202) target = $region36
        $region35: #{roberta_classification_head.1} parent=31 // pred_region
          %s205 = sand.u32 %s25, 1
          %s206 = scalar_lea.sflag [#allocation3], %s205
          %s207 = sand.u32 %s25, 1
          %s208 = smul.addr %s207, 16
          %s209 = scalar_lea.vmem [#allocation2], %s208
          %s211 = ssub.s32 256, 256
          %212 = vsyncadd %s206, %s211
          %s213 = smul.addr %s15, 2
          %s214 = smul.addr %s213, 128
          %s215 = scalar_lea.hbm %s0, %s214
          %s217 = sshll.u32 %s209, 4
          %s218 = int_to_ptr.vmem [resolvable:$true] %s217
          %220 = dma.hbm_to_vmem [thread:$0]  %s215, 256, %s218, %s206
        $region36: #{roberta_classification_head.1} parent=31 // pred_fallthru
          _
      $region32: #{roberta_classification_head.1} parent=5 // pred_fallthru
        _
      %p221 = scmp.le.s32.totalorder 1, %s15
      %p222 = scmp.lt.s32.totalorder %s15, 3
      %p223 = pnand %p221, %p222
      %p224 = pneg %p223
      // Predicated region
      $region37: #{roberta_classification_head.1} parent=5 // pred_check
        _
      $region38: #{roberta_classification_head.1} parent=5 // pred_check_branch
        %226 = sbr.rel (%p223) target = $region40
      $region39: #{roberta_classification_head.1} parent=5 // pred_region
        %s227 = ssub.s32 %s15, 1
        %s228 = sand.u32 %s28, 1
        %s229 = scalar_lea.sflag [#allocation3], %s228
        %s230 = sand.u32 %s28, 1
        %s231 = smul.addr %s230, 16
        %s232 = scalar_lea.vmem [#allocation2], %s231
        // Predicated region
        $region41: #{roberta_classification_head.1} parent=39 // pred_check
          %p233 = pneg %p41
        $region42: #{roberta_classification_head.1} parent=39 // pred_check_branch
          %235 = sbr.rel (%p233) target = $region44
        $region43: #{roberta_classification_head.1} parent=39 // pred_region
          %236 = dma.done %s229, 256
        $region44: #{roberta_classification_head.1} parent=39 // pred_fallthru
          _
        // Predicated region
        $region45: #{roberta_classification_head.1} parent=39 // pred_check
          %p237 = pneg %p62
        $region46: #{roberta_classification_head.1} parent=39 // pred_check_branch
          %239 = sbr.rel (%p237) target = $region48
        $region47: #{roberta_classification_head.1} parent=39 // pred_region
          %240 = dma.done [#allocation5], 4096
        $region48: #{roberta_classification_head.1} parent=39 // pred_fallthru
          _
        // Predicated region
        $region49: #{roberta_classification_head.1} parent=39 // pred_check
          %p241 = pneg %p104
        $region50: #{roberta_classification_head.1} parent=39 // pred_check_branch
          %243 = sbr.rel (%p241) target = $region52
        $region51: #{roberta_classification_head.1} parent=39 // pred_region
          %244 = dma.done [#allocation5], 2048
        $region52: #{roberta_classification_head.1} parent=39 // pred_fallthru
          _
        %s245 = sand.u32 %s28, 1
        %s246 = scalar_lea.sflag [#allocation3], %s245
        %s247 = sand.u32 %s28, 1
        %s248 = smul.addr %s247, 16
        %s249 = scalar_lea.vmem [#allocation2], %s248
        %p250 = pneg %p41
        %p251 = pneg %p38
        %p252 = pneg %p62
        %p253 = pneg %p59
        %p254 = pneg %p83
        %p255 = pneg %p80
        %p256 = pneg %p104
        %p257 = pneg %p101
        %p258 = pneg %p125
        %p259 = pneg %p122
        %p260 = pneg %p151
        %p261 = pneg %p148
        %p262 = scmp.lt.s32.totalorder %s20, 1
        %s263 = scalar_select %p262, %s20, 1
        %s264 = smul.addr %s263, 8
        %s265 = scalar_lea.vmem %s5, %s264
        %p266 = scmp.lt.s32.totalorder %s20, 1
        %s267 = scalar_select %p266, %s20, 1
        %s268 = smul.addr %s267, 8
        %s269 = scalar_lea.vmem %s5, %s268
        %v271 = vld [vmem:[%s232] sm:$0xff]
        %v272 = vld [vmem:[%s232 + $0x8] sm:$0xff]
        %v273 = vpack.c.bf16 %v271, %v271
        %v274 = vpack.c.bf16 %v272, %v272
        %v275 = vld [vmem:[#allocation4] sm:$0xff]
        %v276 = vld [vmem:[#allocation4 + $0x8] sm:$0xff]
        %v277 = vld [vmem:[#allocation4 + $0x10] sm:$0xff]
        %v278 = vld [vmem:[#allocation4 + $0x18] sm:$0xff]
        %v279 = vld [vmem:[#allocation4 + $0x20] sm:$0xff]
        %v280 = vld [vmem:[#allocation4 + $0x28] sm:$0xff]
        %v281 = vld [vmem:[#allocation4 + $0x30] sm:$0xff]
        %v282 = vld [vmem:[#allocation4 + $0x38] sm:$0xff]
        %v283 = vld [vmem:[#allocation4 + $0x40] sm:$0xff]
        %v284 = vld [vmem:[#allocation4 + $0x48] sm:$0xff]
        %v285 = vld [vmem:[#allocation4 + $0x50] sm:$0xff]
        %v286 = vld [vmem:[#allocation4 + $0x58] sm:$0xff]
        %v287 = vld [vmem:[#allocation4 + $0x60] sm:$0xff]
        %v288 = vld [vmem:[#allocation4 + $0x68] sm:$0xff]
        %v289 = vld [vmem:[#allocation4 + $0x70] sm:$0xff]
        %v290 = vld [vmem:[#allocation4 + $0x78] sm:$0xff]
        %v291 = vld [vmem:[#allocation4 + $0x80] sm:$0xff]
        %v292 = vld [vmem:[#allocation4 + $0x88] sm:$0xff]
        %v293 = vld [vmem:[#allocation4 + $0x90] sm:$0xff]
        %v294 = vld [vmem:[#allocation4 + $0x98] sm:$0xff]
        %v295 = vld [vmem:[#allocation4 + $0xa0] sm:$0xff]
        %v296 = vld [vmem:[#allocation4 + $0xa8] sm:$0xff]
        %v297 = vld [vmem:[#allocation4 + $0xb0] sm:$0xff]
        %v298 = vld [vmem:[#allocation4 + $0xb8] sm:$0xff]
        %v299 = vld [vmem:[#allocation4 + $0xc0] sm:$0xff]
        %v300 = vld [vmem:[#allocation4 + $0xc8] sm:$0xff]
        %v301 = vld [vmem:[#allocation4 + $0xd0] sm:$0xff]
        %v302 = vld [vmem:[#allocation4 + $0xd8] sm:$0xff]
        %v303 = vld [vmem:[#allocation4 + $0xe0] sm:$0xff]
        %v304 = vld [vmem:[#allocation4 + $0xe8] sm:$0xff]
        %v305 = vld [vmem:[#allocation4 + $0xf0] sm:$0xff]
        %v306 = vld [vmem:[#allocation4 + $0xf8] sm:$0xff]
        %v307 = vld [vmem:[%s2] sm:$0x3]
        %v309 = vlaneseq
        %v310 = vshrl.u32 %v309, 7
        %v311 = vsub.s32 0, %v310
        %v312 = vrot.slane %v307, %v311
        %v313 = vlaneseq
        %v314 = vshrl.u32 %v313, 7
        %v315 = vsub.s32 1, %v314
        %v316 = vrot.slane %v307, %v315
        %v351 = vunpack.c.l.b16 %v275
        %v352 = vunpack.c.h.b16 %v275
        %v353 = vunpack.c.l.b16 %v276
        %v354 = vunpack.c.h.b16 %v276
        %v355 = vunpack.c.l.b16 %v277
        %v356 = vunpack.c.h.b16 %v277
        %v357 = vunpack.c.l.b16 %v278
        %v358 = vunpack.c.h.b16 %v278
        %v359 = vunpack.c.l.b16 %v279
        %v360 = vunpack.c.h.b16 %v279
        %v361 = vunpack.c.l.b16 %v280
        %v362 = vunpack.c.h.b16 %v280
        %v363 = vunpack.c.l.b16 %v281
        %v364 = vunpack.c.h.b16 %v281
        %v365 = vunpack.c.l.b16 %v282
        %v366 = vunpack.c.h.b16 %v282
        %v367 = vunpack.c.l.b16 %v283
        %v368 = vunpack.c.h.b16 %v283
        %v369 = vunpack.c.l.b16 %v284
        %v370 = vunpack.c.h.b16 %v284
        %v371 = vunpack.c.l.b16 %v285
        %v372 = vunpack.c.h.b16 %v285
        %v373 = vunpack.c.l.b16 %v286
        %v374 = vunpack.c.h.b16 %v286
        %v375 = vunpack.c.l.b16 %v287
        %v376 = vunpack.c.h.b16 %v287
        %v377 = vunpack.c.l.b16 %v288
        %v378 = vunpack.c.h.b16 %v288
        %v379 = vunpack.c.l.b16 %v289
        %v380 = vunpack.c.h.b16 %v289
        %v381 = vunpack.c.l.b16 %v290
        %v382 = vunpack.c.h.b16 %v290
        %v383 = vunpack.c.l.b16 %v291
        %v384 = vunpack.c.h.b16 %v291
        %v385 = vunpack.c.l.b16 %v292
        %v386 = vunpack.c.h.b16 %v292
        %v387 = vunpack.c.l.b16 %v293
        %v388 = vunpack.c.h.b16 %v293
        %v389 = vunpack.c.l.b16 %v294
        %v390 = vunpack.c.h.b16 %v294
        %v391 = vunpack.c.l.b16 %v295
        %v392 = vunpack.c.h.b16 %v295
        %v393 = vunpack.c.l.b16 %v296
        %v394 = vunpack.c.h.b16 %v296
        %v395 = vunpack.c.l.b16 %v297
        %v396 = vunpack.c.h.b16 %v297
        %v397 = vunpack.c.l.b16 %v298
        %v398 = vunpack.c.h.b16 %v298
        %v399 = vunpack.c.l.b16 %v299
        %v400 = vunpack.c.h.b16 %v299
        %v401 = vunpack.c.l.b16 %v300
        %v402 = vunpack.c.h.b16 %v300
        %v403 = vunpack.c.l.b16 %v301
        %v404 = vunpack.c.h.b16 %v301
        %v405 = vunpack.c.l.b16 %v302
        %v406 = vunpack.c.h.b16 %v302
        %v407 = vunpack.c.l.b16 %v303
        %v408 = vunpack.c.h.b16 %v303
        %v409 = vunpack.c.l.b16 %v304
        %v410 = vunpack.c.h.b16 %v304
        %v411 = vunpack.c.l.b16 %v305
        %v412 = vunpack.c.h.b16 %v305
        %v413 = vunpack.c.l.b16 %v306
        %v414 = vunpack.c.h.b16 %v306
        %v415 = vpack.c.b16 %v353, %v351
        %v416 = vpack.c.b16 %v354, %v352
        %v417 = vpack.c.b16 %v357, %v355
        %v418 = vpack.c.b16 %v358, %v356
        %v419 = vpack.c.b16 %v361, %v359
        %v420 = vpack.c.b16 %v362, %v360
        %v421 = vpack.c.b16 %v365, %v363
        %v422 = vpack.c.b16 %v366, %v364
        %v423 = vpack.c.b16 %v369, %v367
        %v424 = vpack.c.b16 %v370, %v368
        %v425 = vpack.c.b16 %v373, %v371
        %v426 = vpack.c.b16 %v374, %v372
        %v427 = vpack.c.b16 %v377, %v375
        %v428 = vpack.c.b16 %v378, %v376
        %v429 = vpack.c.b16 %v381, %v379
        %v430 = vpack.c.b16 %v382, %v380
        %v431 = vpack.c.b16 %v385, %v383
        %v432 = vpack.c.b16 %v386, %v384
        %v433 = vpack.c.b16 %v389, %v387
        %v434 = vpack.c.b16 %v390, %v388
        %v435 = vpack.c.b16 %v393, %v391
        %v436 = vpack.c.b16 %v394, %v392
        %v437 = vpack.c.b16 %v397, %v395
        %v438 = vpack.c.b16 %v398, %v396
        %v439 = vpack.c.b16 %v401, %v399
        %v440 = vpack.c.b16 %v402, %v400
        %v441 = vpack.c.b16 %v405, %v403
        %v442 = vpack.c.b16 %v406, %v404
        %v443 = vpack.c.b16 %v409, %v407
        %v444 = vpack.c.b16 %v410, %v408
        %v445 = vpack.c.b16 %v413, %v411
        %v446 = vpack.c.b16 %v414, %v412
        %479 = vmatprep.subr.bf16.mxu0 %v430
        %480 = vmatpush1.bf16.msra.mxu0 %v429
        %481 = vmatprep.subr.bf16.mxu0 %v428
        %482 = vmatpush1.bf16.msra.mxu0 %v427
        %483 = vmatprep.subr.bf16.mxu0 %v426
        %484 = vmatpush1.bf16.msra.mxu0 %v425
        %485 = vmatprep.subr.bf16.mxu0 %v424
        %486 = vmatpush1.bf16.msra.mxu0 %v423
        %487 = vmatprep.subr.bf16.mxu0 %v422
        %488 = vmatpush1.bf16.msra.mxu0 %v421
        %489 = vmatprep.subr.bf16.mxu0 %v420
        %490 = vmatpush1.bf16.msra.mxu0 %v419
        %491 = vmatprep.subr.bf16.mxu0 %v418
        %492 = vmatpush1.bf16.msra.mxu0 %v417
        %493 = vmatprep.subr.bf16.mxu0 %v416
        %494 = vmatpush1.bf16.msra.mxu0 %v415
        %495 = vmatprep.subr.bf16.mxu0 %v446
        %496 = vmatpush2.bf16.msra.mxu0 %v445
        %497 = vmatprep.subr.bf16.mxu0 %v444
        %498 = vmatpush2.bf16.msra.mxu0 %v443
        %499 = vmatprep.subr.bf16.mxu0 %v442
        %500 = vmatpush2.bf16.msra.mxu0 %v441
        %501 = vmatprep.subr.bf16.mxu0 %v440
        %502 = vmatpush2.bf16.msra.mxu0 %v439
        %503 = vmatprep.subr.bf16.mxu0 %v438
        %504 = vmatpush2.bf16.msra.mxu0 %v437
        %505 = vmatprep.subr.bf16.mxu0 %v436
        %506 = vmatpush2.bf16.msra.mxu0 %v435
        %507 = vmatprep.subr.bf16.mxu0 %v434
        %508 = vmatpush2.bf16.msra.mxu0 %v433
        %509 = vmatprep.subr.bf16.mxu0 %v432
        %510 = vmatpush2.bf16.msra.mxu0 %v431
        %511 = vmatprep.mubr.bf16.mxu0 %v274
        %512 = vmatmul.mubr.bf16.gmra.mxu0 %v273
        %v513 = vpop.f32.mrf.mxu0
        %v514 = vadd.f32 %v312, %v513
        %v515 = vpop.f32.mrf.mxu0
        %v516 = vadd.f32 %v316, %v515
        %v517 = vpop.f32.mrf.mxu0
        %v518 = vpop.f32.mrf.mxu0
        %519 = vdwg.mxu0
        %v520 = vpack.c.bf16 %v514, %v514
        %v521 = vpack.c.bf16 %v516, %v516
        %v522 = vtanh.bf16.pop %v520
        %v523 = vtanh.bf16.pop %v521
        %v524 = vld [vmem:[#allocation6] sm:$0xf]
        %v525 = vld [vmem:[#allocation6 + $0x4] sm:$0xf]
        %v526 = vld [vmem:[#allocation6 + $0x8] sm:$0xf]
        %v527 = vld [vmem:[#allocation6 + $0xc] sm:$0xf]
        %v528 = vld [vmem:[#allocation6 + $0x10] sm:$0xf]
        %v529 = vld [vmem:[#allocation6 + $0x14] sm:$0xf]
        %v530 = vld [vmem:[#allocation6 + $0x18] sm:$0xf]
        %v531 = vld [vmem:[#allocation6 + $0x1c] sm:$0xf]
        %v532 = vld [vmem:[#allocation6 + $0x20] sm:$0xf]
        %v533 = vld [vmem:[#allocation6 + $0x24] sm:$0xf]
        %v534 = vld [vmem:[#allocation6 + $0x28] sm:$0xf]
        %v535 = vld [vmem:[#allocation6 + $0x2c] sm:$0xf]
        %v536 = vld [vmem:[#allocation6 + $0x30] sm:$0xf]
        %v537 = vld [vmem:[#allocation6 + $0x34] sm:$0xf]
        %v538 = vld [vmem:[#allocation6 + $0x38] sm:$0xf]
        %v539 = vld [vmem:[#allocation6 + $0x3c] sm:$0xf]
        %v540 = vld [vmem:[#allocation6 + $0x40] sm:$0xf]
        %v541 = vld [vmem:[#allocation6 + $0x44] sm:$0xf]
        %v542 = vld [vmem:[#allocation6 + $0x48] sm:$0xf]
        %v543 = vld [vmem:[#allocation6 + $0x4c] sm:$0xf]
        %v544 = vld [vmem:[#allocation6 + $0x50] sm:$0xf]
        %v545 = vld [vmem:[#allocation6 + $0x54] sm:$0xf]
        %v546 = vld [vmem:[#allocation6 + $0x58] sm:$0xf]
        %v547 = vld [vmem:[#allocation6 + $0x5c] sm:$0xf]
        %v548 = vld [vmem:[#allocation6 + $0x60] sm:$0xf]
        %v549 = vld [vmem:[#allocation6 + $0x64] sm:$0xf]
        %v550 = vld [vmem:[#allocation6 + $0x68] sm:$0xf]
        %v551 = vld [vmem:[#allocation6 + $0x6c] sm:$0xf]
        %v552 = vld [vmem:[#allocation6 + $0x70] sm:$0xf]
        %v553 = vld [vmem:[#allocation6 + $0x74] sm:$0xf]
        %v554 = vld [vmem:[#allocation6 + $0x78] sm:$0xf]
        %v555 = vld [vmem:[#allocation6 + $0x7c] sm:$0xf]
        %v556 = vld [vmem:[%s4] sm:$0x1]
        %v558 = vlaneseq
        %v559 = vshrl.u32 %v558, 7
        %v560 = vsub.s32 0, %v559
        %v561 = vrot.slane %v556, %v560
        %v595 = vunpack.c.l.b16 %v524
        %v596 = vunpack.c.l.b16 %v525
        %v597 = vunpack.c.l.b16 %v526
        %v598 = vunpack.c.l.b16 %v527
        %v599 = vunpack.c.l.b16 %v528
        %v600 = vunpack.c.l.b16 %v529
        %v601 = vunpack.c.l.b16 %v530
        %v602 = vunpack.c.l.b16 %v531
        %v603 = vunpack.c.l.b16 %v532
        %v604 = vunpack.c.l.b16 %v533
        %v605 = vunpack.c.l.b16 %v534
        %v606 = vunpack.c.l.b16 %v535
        %v607 = vunpack.c.l.b16 %v536
        %v608 = vunpack.c.l.b16 %v537
        %v609 = vunpack.c.l.b16 %v538
        %v610 = vunpack.c.l.b16 %v539
        %v611 = vunpack.c.l.b16 %v540
        %v612 = vunpack.c.l.b16 %v541
        %v613 = vunpack.c.l.b16 %v542
        %v614 = vunpack.c.l.b16 %v543
        %v615 = vunpack.c.l.b16 %v544
        %v616 = vunpack.c.l.b16 %v545
        %v617 = vunpack.c.l.b16 %v546
        %v618 = vunpack.c.l.b16 %v547
        %v619 = vunpack.c.l.b16 %v548
        %v620 = vunpack.c.l.b16 %v549
        %v621 = vunpack.c.l.b16 %v550
        %v622 = vunpack.c.l.b16 %v551
        %v623 = vunpack.c.l.b16 %v552
        %v624 = vunpack.c.l.b16 %v553
        %v625 = vunpack.c.l.b16 %v554
        %v626 = vunpack.c.l.b16 %v555
        %v627 = vpack.c.b16 %v596, %v595
        %v628 = vpack.c.b16 %v598, %v597
        %v629 = vpack.c.b16 %v600, %v599
        %v630 = vpack.c.b16 %v602, %v601
        %v631 = vpack.c.b16 %v604, %v603
        %v632 = vpack.c.b16 %v606, %v605
        %v633 = vpack.c.b16 %v608, %v607
        %v634 = vpack.c.b16 %v610, %v609
        %v635 = vpack.c.b16 %v612, %v611
        %v636 = vpack.c.b16 %v614, %v613
        %v637 = vpack.c.b16 %v616, %v615
        %v638 = vpack.c.b16 %v618, %v617
        %v639 = vpack.c.b16 %v620, %v619
        %v640 = vpack.c.b16 %v622, %v621
        %v641 = vpack.c.b16 %v624, %v623
        %v642 = vpack.c.b16 %v626, %v625
        %659 = vmatprep.subr.bf16.mxu0 0
        %660 = vmatpush1.bf16.msra.mxu0 %v634
        %661 = vmatprep.subr.bf16.mxu0 0
        %662 = vmatpush1.bf16.msra.mxu0 %v633
        %663 = vmatprep.subr.bf16.mxu0 0
        %664 = vmatpush1.bf16.msra.mxu0 %v632
        %665 = vmatprep.subr.bf16.mxu0 0
        %666 = vmatpush1.bf16.msra.mxu0 %v631
        %667 = vmatprep.subr.bf16.mxu0 0
        %668 = vmatpush1.bf16.msra.mxu0 %v630
        %669 = vmatprep.subr.bf16.mxu0 0
        %670 = vmatpush1.bf16.msra.mxu0 %v629
        %671 = vmatprep.subr.bf16.mxu0 0
        %672 = vmatpush1.bf16.msra.mxu0 %v628
        %673 = vmatprep.subr.bf16.mxu0 0
        %674 = vmatpush1.bf16.msra.mxu0 %v627
        %675 = vmatprep.subr.bf16.mxu0 0
        %676 = vmatpush2.bf16.msra.mxu0 %v642
        %677 = vmatprep.subr.bf16.mxu0 0
        %678 = vmatpush2.bf16.msra.mxu0 %v641
        %679 = vmatprep.subr.bf16.mxu0 0
        %680 = vmatpush2.bf16.msra.mxu0 %v640
        %681 = vmatprep.subr.bf16.mxu0 0
        %682 = vmatpush2.bf16.msra.mxu0 %v639
        %683 = vmatprep.subr.bf16.mxu0 0
        %684 = vmatpush2.bf16.msra.mxu0 %v638
        %685 = vmatprep.subr.bf16.mxu0 0
        %686 = vmatpush2.bf16.msra.mxu0 %v637
        %687 = vmatprep.subr.bf16.mxu0 0
        %688 = vmatpush2.bf16.msra.mxu0 %v636
        %689 = vmatprep.subr.bf16.mxu0 0
        %690 = vmatpush2.bf16.msra.mxu0 %v635
        %691 = vmatprep.mubr.bf16.mxu0 %v523
        %692 = vmatmul.mubr.bf16.gmra.mxu0 %v522
        %v693 = vpop.f32.mrf.mxu0
        %v694 = vadd.f32 %v561, %v693
        %v695 = vpop.f32.mrf.mxu0
        %v696 = vpop.f32.mrf.mxu0
        %v697 = vpop.f32.mrf.mxu0
        %698 = vdwg.mxu0
        %699 = vst [vmem:[%s269] sm:$0xff] %v694
        %p700 = scmp.lt.s32.totalorder %s20, 1
        %s701 = scalar_select %p700, %s20, 1
        %s702 = smul.addr %s701, 8
        %s703 = scalar_lea.vmem %s5, %s702
        // Predicated region
        $region53: #{roberta_classification_head.1} parent=39 // pred_check
          %p704 = pneg %p148
        $region54: #{roberta_classification_head.1} parent=39 // pred_check_branch
          %706 = sbr.rel (%p704) target = $region56
        $region55: #{roberta_classification_head.1} parent=39 // pred_region
          _
        $region56: #{roberta_classification_head.1} parent=39 // pred_fallthru
          _
      $region40: #{roberta_classification_head.1} parent=5 // pred_fallthru
        _
      %p707 = scmp.le.s32.totalorder 2, %s15
      // Predicated region
      $region57: #{roberta_classification_head.1} parent=5 // pred_check
        %p708 = pneg %p707
      $region58: #{roberta_classification_head.1} parent=5 // pred_check_branch
        %710 = sbr.rel (%p708) target = $region60
      $region59: #{roberta_classification_head.1} parent=5 // pred_region
        %s711 = ssub.s32 %s15, 2
        // Predicated region
        $region61: #{roberta_classification_head.1} parent=59 // pred_check
          %p712 = pneg %p154
        $region62: #{roberta_classification_head.1} parent=59 // pred_check_branch
          %714 = sbr.rel (%p712) target = $region64
        $region63: #{roberta_classification_head.1} parent=59 // pred_region
          %p715 = scmp.lt.s32.totalorder %s21, 1
          %s716 = scalar_select %p715, %s21, 1
          %s717 = smul.addr %s716, 8
          %s718 = scalar_lea.vmem %s5, %s717
        $region64: #{roberta_classification_head.1} parent=59 // pred_fallthru
          _
      $region60: #{roberta_classification_head.1} parent=5 // pred_fallthru
        _
    $region6: #{roberta_classification_head.1} parent=1 // loop_footer
      %s19 = sadd.s32 1, %s15
    $region7: #{roberta_classification_head.1} parent=1 // loop_footer_branch
      %14 = sbr.rel target = $region3
    $region8: #{roberta_classification_head.1} parent=1 // loop_exit
      _
    %719 = vsyncpa [#allocation3], 1
    %s720 = scalar_lea.sflag [#allocation3], 1
    %721 = vsyncpa %s720, 1
    %722 = vsyncpa [#allocation5], 1

</llo_original>
